<compile_context>
chip_gen: v7x
topology: tpu7x:2x2x1
jax: 0.10.0
libtpu: 0.0.40
codegen_flags: <defaults>
</compile_context>

<pallas_src>
import jax
import jax.numpy as jnp
from jax.experimental import pallas as pl
from jax.experimental.pallas import tpu as pltpu


def _vmem_capacity_bytes() -> int:
    """Per-core VMEM capacity; conservative 64 MiB (v7x) fallback."""
    try:
        info = pltpu.get_tpu_info()
        cap = getattr(info, "vmem_capacity_bytes", None)
        if cap:
            return int(cap)
    except Exception:
        pass
    return 64 * 1024 * 1024


def _sublane_quantum(dtype) -> int:
    # 8 for f32, 16 for bf16/f16, 32 for int8/fp8: keeps blocks on native
    # packed-sublane tiles (unmasked stores, no relayout shuffles).
    return max(8, 32 // jnp.dtype(dtype).itemsize)


def _choose_tiles(N, L, d, in_itemsize, out_itemsize, budget, in_sublane,
                  out_sublane, min_steps=8):
    """Pick (tn, tl): rows per grid step and sequence positions per step."""
    # Approximate VMEM per (row, position): x tile double-buffered plus ~one
    # f32 working copy (covers the sub-32-bit upcast / masking temps).
    per_pos_per_row = d * (2 * in_itemsize + 4)
    # Per row: f32 max/sum accumulators + double-buffered (2d) output + invd.
    per_row_fixed = 2 * d * 4 + 2 * (2 * d) * out_itemsize + 16

    # --- Path A: whole sequence resident per grid step (single L block). ---
    tn = budget // (L * per_pos_per_row + per_row_fixed)
    if tn >= min(N, out_sublane):
        # Cap so the grid keeps >= min_steps row blocks: enables double
        # buffering and megacore sharding of the "parallel" batch axis.
        cap = pl.cdiv(N, min_steps)
        if cap >= out_sublane:
            tn = min(tn, cap)
        if tn >= N:
            return N, L
        tn = max(out_sublane, (tn // out_sublane) * out_sublane)
        return min(tn, N), L

    # --- Path B: L-tiled accumulator. Smallest legal row block, tile L. ---
    tn = min(N, out_sublane)
    tl = max(0, budget - tn * per_row_fixed) // max(1, tn * per_pos_per_row)
    # Round to the input dtype's sublane quantum (may slightly exceed the
    # budget only for absurdly large d; accepted).
    tl = max(in_sublane, (tl // in_sublane) * in_sublane)
    return tn, min(tl, L)


def _make_kernel(d, L, tl):
    ragged_l = (L % tl) != 0

    def kernel(x_ref, invd_ref, out_ref, max_sc, sum_sc):
        # x_ref:    (TN, TL, d)   block of rows / sequence positions
        # invd_ref: (TN, 1)       f32, 1 / sum(mask) per row
        # out_ref:  (TN, 2d)      fused [max | mean] output
        # max_sc / sum_sc: (TN, d) f32 running accumulators
        l = pl.program_id(1)

        xf = x_ref[...].astype(jnp.float32)                 # (TN, TL, d)
        if ragged_l:
            # Mask out-of-range sequence positions in the last (ragged) block.
            pos = jax.lax.broadcasted_iota(jnp.int32, xf.shape, 1) + l * tl
            valid = pos < L
            x_max = jnp.where(valid, xf, -jnp.inf)
            x_sum = jnp.where(valid, xf, 0.0)
        else:
            x_max = xf
            x_sum = xf

        blk_max = jnp.max(x_max, axis=1)                    # (TN, d) f32 (exact)
        blk_sum = jnp.sum(x_sum, axis=1)                    # (TN, d) f32 accumulation

        @pl.when(l == 0)
        def _():
            max_sc[...] = blk_max
            sum_sc[...] = blk_sum

        @pl.when(l > 0)
        def _():
            max_sc[...] = jnp.maximum(max_sc[...], blk_max)
            sum_sc[...] = sum_sc[...] + blk_sum

        @pl.when(l == pl.num_programs(1) - 1)
        def _():
            out_ref[:, :d] = max_sc[...].astype(out_ref.dtype)
            out_ref[:, d:] = (sum_sc[...] * invd_ref[...]).astype(out_ref.dtype)

    return kernel


def mean_max_pooling(doc_state: jax.Array, mask: jax.Array,
                     *, _force_tiles=None) -> jax.Array:
    """doc_state: [N, L, d]; mask: [N, L]. Returns [N, 2d] = [max | mean]."""
    N, L, d = doc_state.shape
    assert mask.shape == (N, L)

    # Tiny XLA reduce in the wrapper: exact f32 reciprocal of the mask sum.
    # (Kept exact rather than pl.reciprocal(approx=True) to match the torch
    # division to ~ulp precision; it's only N scalars either way.)
    inv_denom = 1.0 / jnp.sum(mask.astype(jnp.float32), axis=1, keepdims=True)

    in_itemsize = jnp.dtype(doc_state.dtype).itemsize
    in_sublane = _sublane_quantum(doc_state.dtype)
    out_sublane = in_sublane  # output dtype == input dtype

    vmem_cap = _vmem_capacity_bytes()
    tile_budget = vmem_cap // 2          # generation-aware: 32 MiB v7x, 64 MiB v5e/v6e
    vmem_limit = (vmem_cap * 3) // 4

    if _force_tiles is not None:
        tn, tl = _force_tiles
    else:
        tn, tl = _choose_tiles(N, L, d, in_itemsize, in_itemsize, tile_budget,
                               in_sublane, out_sublane)
    tn = min(tn, N)
    tl = min(tl, L)

    grid = (pl.cdiv(N, tn), pl.cdiv(L, tl))

    out = pl.pallas_call(
        _make_kernel(d, L, tl),
        out_shape=jax.ShapeDtypeStruct((N, 2 * d), doc_state.dtype),
        grid_spec=pltpu.PrefetchScalarGridSpec(
            num_scalar_prefetch=0,
            grid=grid,
            in_specs=[
                pl.BlockSpec((tn, tl, d), lambda n, l: (n, l, 0)),
                pl.BlockSpec((tn, 1), lambda n, l: (n, 0)),
            ],
            out_specs=pl.BlockSpec((tn, 2 * d), lambda n, l: (n, 0)),
            scratch_shapes=[
                pltpu.VMEM((tn, d), jnp.float32),   # running max
                pltpu.VMEM((tn, d), jnp.float32),   # running sum
            ],
        ),
        compiler_params=pltpu.CompilerParams(
            dimension_semantics=("parallel", "arbitrary"),
            vmem_limit_bytes=vmem_limit,
        ),
    )(doc_state, inv_denom)

    return out


def _reference(doc_state, mask):
    max_pooled = jnp.max(doc_state, axis=1)
    mean_pooled = jnp.sum(doc_state, axis=1) / jnp.sum(mask, axis=1)[:, None]
    return jnp.concatenate([max_pooled, mean_pooled], axis=1)


if __name__ == "__main__":
    key = jax.random.PRNGKey(0)
    k1, k2, k3, k4 = jax.random.split(key, 4)

    # Small shapes implied by the module: doc_state [N, L, d], mask [N, L].
    N, L, d = 2, 8, 32
    doc_state = jax.random.normal(k1, (N, L, d), dtype=jnp.float32)
    mask = (jax.random.uniform(k2, (N, L)) > 0.3).astype(jnp.float32)
    mask = mask.at[:, 0].set(1.0)          # at least one valid position per row

    out = jax.block_until_ready(mean_max_pooling(doc_state, mask))
    ref = _reference(doc_state, mask)
    assert out.shape == (N, 2 * d)
    assert jnp.allclose(out, ref, atol=1e-5, rtol=1e-5), \
        float(jnp.max(jnp.abs(out - ref)))

    # Also exercise the L-tiled accumulator path with ragged row / L blocks.
    N2, L2, d2 = 10, 20, 128
    ds2 = jax.random.normal(k3, (N2, L2, d2), dtype=jnp.float32)
    m2 = (jax.random.uniform(k4, (N2, L2)) > 0.3).astype(jnp.float32)
    m2 = m2.at[:, 0].set(1.0)
    out2 = jax.block_until_ready(mean_max_pooling(ds2, m2, _force_tiles=(8, 8)))
    ref2 = _reference(ds2, m2)
    assert out2.shape == (N2, 2 * d2)
    assert jnp.allclose(out2, ref2, atol=1e-5, rtol=1e-5), \
        float(jnp.max(jnp.abs(out2 - ref2)))

    print("KERNEL_OK")
</pallas_src>

<mosaic_0001>
module attributes {stable_mosaic.version = 11 : i64} {
  func.func @kernel(%arg0: i32, %arg1: i32, %arg2: memref<2x8x32xf32, #tpu.memory_space<vmem>>, %arg3: memref<2x1xf32, #tpu.memory_space<vmem>>, %arg4: memref<2x64xf32, #tpu.memory_space<vmem>>, %arg5: memref<2x32xf32, #tpu.memory_space<vmem>>, %arg6: memref<2x32xf32, #tpu.memory_space<vmem>>) attributes {dimension_semantics = [#tpu.dimension_semantics<parallel>, #tpu.dimension_semantics<arbitrary>], iteration_bounds = array<i64: 1, 1>, scalar_prefetch = 0 : i64, scratch_operands = 2 : i64, tpu.core_type = #tpu.core_type<tc>, window_params = [{transform_indices = @transform_0, window_bounds = array<i64: 2, 8, 32>}, {transform_indices = @transform_1, window_bounds = array<i64: 2, 1>}, {transform_indices = @transform_2, window_bounds = array<i64: 2, 64>}]} {
    %c0 = arith.constant 0 : index
    %c0_0 = arith.constant 0 : index
    %c0_1 = arith.constant 0 : index
    %0 = vector.load %arg2[%c0, %c0_0, %c0_1] : memref<2x8x32xf32, #tpu.memory_space<vmem>>, vector<2x8x32xf32>
    %cst = arith.constant dense<0xFF800000> : vector<2x32xf32>
    %1 = vector.multi_reduction <maximumf>, %0, %cst [1] : vector<2x8x32xf32> to vector<2x32xf32>
    %cst_2 = arith.constant dense<0.000000e+00> : vector<2x32xf32>
    %2 = vector.multi_reduction <add>, %0, %cst_2 [1] : vector<2x8x32xf32> to vector<2x32xf32>
    %c0_i32 = arith.constant 0 : i32
    %3 = arith.cmpi eq, %arg1, %c0_i32 : i32
    %4 = arith.extui %3 : i1 to i32
    %c0_i32_3 = arith.constant 0 : i32
    %5 = arith.cmpi ne, %4, %c0_i32_3 : i32
    scf.if %5 {
      %c0_8 = arith.constant 0 : index
      %c0_9 = arith.constant 0 : index
      %12 = vector.load %arg5[%c0_8, %c0_9] : memref<2x32xf32, #tpu.memory_space<vmem>>, vector<2x32xf32>
      tpu.vector_store %arg5[%c0_8, %c0_9], %1 {strides = array<i32>} : memref<2x32xf32, #tpu.memory_space<vmem>>, vector<2x32xf32>,
      %c0_10 = arith.constant 0 : index
      %c0_11 = arith.constant 0 : index
      %13 = vector.load %arg6[%c0_10, %c0_11] : memref<2x32xf32, #tpu.memory_space<vmem>>, vector<2x32xf32>
      tpu.vector_store %arg6[%c0_10, %c0_11], %2 {strides = array<i32>} : memref<2x32xf32, #tpu.memory_space<vmem>>, vector<2x32xf32>,
    } else {
    }
    %c0_i32_4 = arith.constant 0 : i32
    %6 = arith.cmpi sgt, %arg1, %c0_i32_4 : i32
    %7 = arith.extui %6 : i1 to i32
    %c0_i32_5 = arith.constant 0 : i32
    %8 = arith.cmpi ne, %7, %c0_i32_5 : i32
    scf.if %8 {
      %c0_8 = arith.constant 0 : index
      %c0_9 = arith.constant 0 : index
      %12 = vector.load %arg5[%c0_8, %c0_9] : memref<2x32xf32, #tpu.memory_space<vmem>>, vector<2x32xf32>
      %13 = arith.maximumf %12, %1 : vector<2x32xf32>
      %c0_10 = arith.constant 0 : index
      %c0_11 = arith.constant 0 : index
      %14 = vector.load %arg5[%c0_10, %c0_11] : memref<2x32xf32, #tpu.memory_space<vmem>>, vector<2x32xf32>
      tpu.vector_store %arg5[%c0_10, %c0_11], %13 {strides = array<i32>} : memref<2x32xf32, #tpu.memory_space<vmem>>, vector<2x32xf32>,
      %c0_12 = arith.constant 0 : index
      %c0_13 = arith.constant 0 : index
      %15 = vector.load %arg6[%c0_12, %c0_13] : memref<2x32xf32, #tpu.memory_space<vmem>>, vector<2x32xf32>
      %16 = arith.addf %15, %2 : vector<2x32xf32>
      %c0_14 = arith.constant 0 : index
      %c0_15 = arith.constant 0 : index
      %17 = vector.load %arg6[%c0_14, %c0_15] : memref<2x32xf32, #tpu.memory_space<vmem>>, vector<2x32xf32>
      tpu.vector_store %arg6[%c0_14, %c0_15], %16 {strides = array<i32>} : memref<2x32xf32, #tpu.memory_space<vmem>>, vector<2x32xf32>,
    } else {
    }
    %c0_i32_6 = arith.constant 0 : i32
    %9 = arith.cmpi eq, %arg1, %c0_i32_6 : i32
    %10 = arith.extui %9 : i1 to i32
    %c0_i32_7 = arith.constant 0 : i32
    %11 = arith.cmpi ne, %10, %c0_i32_7 : i32
    scf.if %11 {
      %c0_8 = arith.constant 0 : index
      %c0_9 = arith.constant 0 : index
      %12 = vector.load %arg5[%c0_8, %c0_9] : memref<2x32xf32, #tpu.memory_space<vmem>>, vector<2x32xf32>
      %c0_10 = arith.constant 0 : index
      %c0_11 = arith.constant 0 : index
      %13 = vector.load %arg4[%c0_10, %c0_11] : memref<2x64xf32, #tpu.memory_space<vmem>>, vector<2x32xf32>
      tpu.vector_store %arg4[%c0_10, %c0_11], %12 {strides = array<i32>} : memref<2x64xf32, #tpu.memory_space<vmem>>, vector<2x32xf32>,
      %c0_12 = arith.constant 0 : index
      %c0_13 = arith.constant 0 : index
      %14 = vector.load %arg6[%c0_12, %c0_13] : memref<2x32xf32, #tpu.memory_space<vmem>>, vector<2x32xf32>
      %c0_14 = arith.constant 0 : index
      %c0_15 = arith.constant 0 : index
      %15 = vector.load %arg3[%c0_14, %c0_15] : memref<2x1xf32, #tpu.memory_space<vmem>>, vector<2x1xf32>
      %16 = vector.broadcast %15 : vector<2x1xf32> to vector<2x32xf32>
      %17 = arith.mulf %14, %16 : vector<2x32xf32>
      %c0_16 = arith.constant 0 : index
      %c32 = arith.constant 32 : index
      %18 = vector.load %arg4[%c0_16, %c32] : memref<2x64xf32, #tpu.memory_space<vmem>>, vector<2x32xf32>
      tpu.vector_store %arg4[%c0_16, %c32], %17 {strides = array<i32>} : memref<2x64xf32, #tpu.memory_space<vmem>>, vector<2x32xf32>,
    } else {
    }
    return
  }
  func.func @transform_0(%arg0: i32, %arg1: i32) -> (i32, i32, i32) {
    %c0_i32 = arith.constant 0 : i32
    %c0_i32_0 = arith.constant 0 : i32
    return %arg0, %arg1, %c0_i32 : i32, i32, i32
  }
  func.func @transform_1(%arg0: i32, %arg1: i32) -> (i32, i32) {
    %c0_i32 = arith.constant 0 : i32
    %c0_i32_0 = arith.constant 0 : i32
    return %arg0, %c0_i32 : i32, i32
  }
  func.func @transform_2(%arg0: i32, %arg1: i32) -> (i32, i32) {
    %c0_i32 = arith.constant 0 : i32
    %c0_i32_0 = arith.constant 0 : i32
    return %arg0, %c0_i32 : i32, i32
  }
}

</mosaic_0001>

<llo_original>
// kernel: tpu_custom_call.1
$region0: #{tpu_custom_call.1}
  #allocation0 [shape = 'u32[]', space=smem, size = 0x4, offset = 0x4, fixed_abs, tag = 'smem constant byte address 0x4 - core index']
  #allocation1 [shape = 'u32[144,128]{1,0:T(1,128)}', space=vmem, size = 0x12000, scoped, tag = 'internal scratch']
  #allocation2 [shape = 'f32[2,32]{1,0:T(2,128)}', space=vmem, size = 0x400, scoped, tag = 'scratch operand']
  #allocation3 [shape = 'f32[2,32]{1,0:T(2,128)}', space=vmem, size = 0x400, scoped, tag = 'scratch operand']
  %s0 = inlined_call_operand.hbm [shape: f32[2,8,32], index: 0, kind: input, shape index: {}]
  %s1 = inlined_call_operand.vmem [shape: f32[2,1], index: 1, kind: input, shape index: {}]
  %s2 = inlined_call_operand.hbm [shape: f32[2,64], index: 2, kind: output, shape index: {}]
  %s3 = sld [smem:[#allocation0]]
  $region34: #{tpu_custom_call.1} parent=0
    _
  %s5 = ssub.s32 1, %s3
  %s6 = scalar_select 0, %s5, %s3
  $region1: #{tpu_custom_call.1} parent=0
    #allocation4 [shape = 'u8[8192]{0}', space=vmem, size = 0x2000, scoped, tag = 'input window, operand 0, single buffered']
    #allocation5 [shape = 's32[1]{0}', space=sflag, size = 0x4, scoped, tag = 'scoped memory for tpu_custom_call.1']
    #allocation6 [shape = 's32[1]{0}', space=sflag, size = 0x4, scoped, tag = 'scoped memory for tpu_custom_call.1']
    #allocation7 [shape = 'u8[1024]{0}', space=vmem, size = 0x400, scoped, tag = 'output window, operand 0, single buffered']
    %7 = vsyncpa [#allocation5], 0
    %8 = vsyncpa [#allocation6], 0
    // Predicated region
    $region2: #{tpu_custom_call.1} parent=1 // pred_check
      _
    $region3: #{tpu_custom_call.1} parent=1 // pred_check_branch
      %10 = sbr.rel (0) target = $region5
    $region4: #{tpu_custom_call.1} parent=1 // pred_region
      %s12 = ssub.s32 256, 256
      %13 = vsyncadd [#allocation5], %s12
      %s14 = sshll.u32 [#allocation4], 4
      %s15 = int_to_ptr.vmem [resolvable:$true] %s14
      %20 = dma.hbm_to_vmem [thread:$0]  %s0, 256, %s15, [#allocation5], 128, 128, 8
    $region5: #{tpu_custom_call.1} parent=1 // pred_fallthru
      _
    // Predicated region
    $region6: #{tpu_custom_call.1} parent=1 // pred_check
      _
    $region7: #{tpu_custom_call.1} parent=1 // pred_check_branch
      %22 = sbr.rel (0) target = $region9
    $region8: #{tpu_custom_call.1} parent=1 // pred_region
      _
    $region9: #{tpu_custom_call.1} parent=1 // pred_fallthru
      _
    // Predicated region
    $region10: #{tpu_custom_call.1} parent=1 // pred_check
      _
    $region11: #{tpu_custom_call.1} parent=1 // pred_check_branch
      %24 = sbr.rel (0) target = $region13
    $region12: #{tpu_custom_call.1} parent=1 // pred_region
      %25 = dma.done [#allocation5], 256
    $region13: #{tpu_custom_call.1} parent=1 // pred_fallthru
      _
    %v26 = vld [vmem:[#allocation4] sm:$0xff]
    %v27 = vld [vmem:[#allocation4 + $0x8] sm:$0xff]
    %vm28 = vcmask 261120
    %v29 = vsel %vm28, %v26, -inf
    %v30 = vrot.slane %v29, 4
    %v31 = vmax.f32 %v29, %v30
    %v32 = vrot.slane %v31, 2
    %v33 = vmax.f32 %v31, %v32
    %v34 = vrot.slane %v33, 1
    %v35 = vmax.f32 %v33, %v34
    %v36 = vsel %vm28, %v27, -inf
    %v37 = vrot.slane %v36, 4
    %v38 = vmax.f32 %v36, %v37
    %v39 = vrot.slane %v38, 2
    %v40 = vmax.f32 %v38, %v39
    %v41 = vrot.slane %v40, 1
    %v42 = vmax.f32 %v40, %v41
    %v43 = vsel %vm28, %v26, 0.0
    %v44 = vrot.slane %v43, 4
    %v45 = vadd.f32 %v43, %v44
    %v46 = vrot.slane %v45, 2
    %v47 = vadd.f32 %v45, %v46
    %v48 = vrot.slane %v47, 1
    %v49 = vadd.f32 %v47, %v48
    %v50 = vsel %vm28, %v27, 0.0
    %v51 = vrot.slane %v50, 4
    %v52 = vadd.f32 %v50, %v51
    %v53 = vrot.slane %v52, 2
    %v54 = vadd.f32 %v52, %v53
    %v55 = vrot.slane %v54, 1
    %v56 = vadd.f32 %v54, %v55
    %p57 = scmp.eq.s32.totalorder 0, 0
    // Predicated region
    $region14: #{tpu_custom_call.1} parent=1 // pred_check
      %p58 = pneg %p57
    $region15: #{tpu_custom_call.1} parent=1 // pred_check_branch
      %60 = sbr.rel (%p58) target = $region17
    $region16: #{tpu_custom_call.1} parent=1 // pred_region
      %vm63 = vcmask 1041409
      %v64 = vsel %vm63, %v42, %v35
      %vm66 = vcmask 254976
      %67 = vst.msk [vmem:[#allocation2] sm:$0x3] %vm66, %v64
      %v70 = vsel %vm63, %v56, %v49
      %72 = vst.msk [vmem:[#allocation3] sm:$0x3] %vm66, %v70
    $region17: #{tpu_custom_call.1} parent=1 // pred_fallthru
      _
    %p73 = scmp.gt.s32.totalorder 0, 0
    // Predicated region
    $region18: #{tpu_custom_call.1} parent=1 // pred_check
      %p74 = pneg %p73
    $region19: #{tpu_custom_call.1} parent=1 // pred_check_branch
      %76 = sbr.rel (%p74) target = $region21
    $region20: #{tpu_custom_call.1} parent=1 // pred_region
      %v77 = vld [vmem:[#allocation2] sm:$0x3]
      %vm80 = vcmask 1041409
      %v81 = vsel %vm80, %v42, %v35
      %v83 = vmax.f32 %v77, %v81
      %vm84 = vcmask 254976
      %85 = vst.msk [vmem:[#allocation2] sm:$0x3] %vm84, %v83
      %v86 = vld [vmem:[#allocation3] sm:$0x3]
      %v89 = vsel %vm80, %v56, %v49
      %v91 = vadd.f32 %v86, %v89
      %92 = vst.msk [vmem:[#allocation3] sm:$0x3] %vm84, %v91
    $region21: #{tpu_custom_call.1} parent=1 // pred_fallthru
      _
    // Predicated region
    $region22: #{tpu_custom_call.1} parent=1 // pred_check
      %p93 = pneg %p57
    $region23: #{tpu_custom_call.1} parent=1 // pred_check_branch
      %95 = sbr.rel (%p93) target = $region25
    $region24: #{tpu_custom_call.1} parent=1 // pred_region
      %v96 = vld [vmem:[#allocation2] sm:$0x3]
      %vm97 = vcmask 254976
      %98 = vst.msk [vmem:[#allocation7] sm:$0x3] %vm97, %v96
      %v99 = vld [vmem:[#allocation3] sm:$0x3]
      %v100 = vld [vmem:[%s1] sm:$0x3]
      %102 = vset.pattern.permute.xlu0 0
      %103 = vperm.xlu0 %102, %v100
      %v104 = vpop.permute.xlu0 %103
      %v106 = vmul.f32 %v99, %v104
      %108 = vrot.lane.b32.xlu0 %v106, 32
      %v109 = vpop.permute.xlu0 %108
      %vm111 = vcmask 517376
      %112 = vst.msk [vmem:[#allocation7] sm:$0x3] %vm111, %v109
    $region25: #{tpu_custom_call.1} parent=1 // pred_fallthru
      _
    // Predicated region
    $region26: #{tpu_custom_call.1} parent=1 // pred_check
      _
    $region27: #{tpu_custom_call.1} parent=1 // pred_check_branch
      %114 = sbr.rel (0) target = $region29
    $region28: #{tpu_custom_call.1} parent=1 // pred_region
      %s116 = ssub.s32 32, 32
      %117 = vsyncadd [#allocation6], %s116
      %s119 = sshll.u32 [#allocation7], 4
      %s120 = int_to_ptr.vmem [resolvable:$true] %s119
      %122 = dma.vmem_to_hbm [thread:$0]  %s120, 32, %s2, [#allocation6]
    $region29: #{tpu_custom_call.1} parent=1 // pred_fallthru
      _
    // Predicated region
    $region30: #{tpu_custom_call.1} parent=1 // pred_check
      _
    $region31: #{tpu_custom_call.1} parent=1 // pred_check_branch
      %124 = sbr.rel (0) target = $region33
    $region32: #{tpu_custom_call.1} parent=1 // pred_region
      %125 = dma.done [#allocation6], 32
    $region33: #{tpu_custom_call.1} parent=1 // pred_fallthru
      _
    %126 = vsyncpa [#allocation5], 1
    %127 = vsyncpa [#allocation6], 1

</llo_original>
